<compile_context>
chip_gen: v6e
topology: v6e:2x2x1
jax: 0.10.0
libtpu: 0.0.40
codegen_flags: <defaults>
</compile_context>

<pallas_src>
import jax
import jax.numpy as jnp
from jax.experimental import pallas as pl
from jax.experimental.pallas import tpu as pltpu

HIDDEN = 256
MAX_BATCH_TILE = 1024   # multiple of 16; ~2 MiB VMEM even at 1024 rows

MODEL_ONLINE = 1
MODEL_TARGET = 2


def _round_up(x, m):
    return ((x + m - 1) // m) * m


def _pick_batch_tile(batch):
    """Batch tile: multiple of 16 rows, <=1024, and >=2 grid steps for large
    batches so v7x's 2 TensorCores both get work (no-op on v5e/v6e)."""
    return min(MAX_BATCH_TILE, _round_up(max(pl.cdiv(batch, 2), 1), 16))


def _mlp_cost(batch, obs_dim, act_dim, n_models):
    flops = 2 * batch * (obs_dim * HIDDEN + HIDDEN * HIDDEN + HIDDEN * act_dim)
    weight_bytes = 2 * (obs_dim * HIDDEN + HIDDEN * HIDDEN + HIDDEN * act_dim)
    bias_bytes = 4 * (HIDDEN + HIDDEN + act_dim)
    bytes_accessed = (batch * obs_dim * 4                     # obs (f32, read per model pass)
                      + n_models * (weight_bytes + bias_bytes)
                      + n_models * batch * act_dim * 4)        # q out (f32)
    return pl.CostEstimate(flops=n_models * flops, transcendentals=0,
                           bytes_accessed=bytes_accessed)


def _ddqn_mlp_kernel(x_ref, w1_ref, b1_ref, w2_ref, b2_ref, w3_ref, b3_ref,
                     o_ref):
    """One batch tile: x (TB, obs_dim) f32 -> q (TB, action_dim) f32."""
    # Cast to bf16 in-kernel (keeps the wrapper free of extra XLA ops).
    x = x_ref[...].astype(jnp.bfloat16)

    # Layer 1: Linear + ReLU (f32 MXU accumulate, f32 epilogue, bf16 carry).
    h1 = jnp.dot(x, w1_ref[...], preferred_element_type=jnp.float32)
    h1 = jnp.maximum(h1 + b1_ref[...], 0.0).astype(jnp.bfloat16)

    # Layer 2: Linear + ReLU.
    h2 = jnp.dot(h1, w2_ref[...], preferred_element_type=jnp.float32)
    h2 = jnp.maximum(h2 + b2_ref[...], 0.0).astype(jnp.bfloat16)

    # Layer 3: Linear (narrow action_dim output; masked store is tiny).
    q = jnp.dot(h2, w3_ref[...], preferred_element_type=jnp.float32)
    o_ref[...] = (q + b3_ref[...]).astype(o_ref.dtype)


@jax.jit
def ddqn_mlp_pallas(obs, w1, b1, w2, b2, w3, b3):
    """Single-model forward.  obs: (batch, obs_dim) f32 -> (batch, act_dim) f32."""
    batch, obs_dim = obs.shape
    act_dim = w3.shape[1]
    tb = _pick_batch_tile(batch)
    grid = (pl.cdiv(batch, tb),)
    const = lambda i: (0, 0)    # weights/biases: same block every step -> resident

    return pl.pallas_call(
        _ddqn_mlp_kernel,
        out_shape=jax.ShapeDtypeStruct((batch, act_dim), jnp.float32),
        grid=grid,
        in_specs=[
            pl.BlockSpec((tb, obs_dim), lambda i: (i, 0)),   # obs tile (f32)
            pl.BlockSpec((obs_dim, HIDDEN), const),          # w1 (bf16, resident)
            pl.BlockSpec((1, HIDDEN), const),                # b1 (f32)
            pl.BlockSpec((HIDDEN, HIDDEN), const),           # w2
            pl.BlockSpec((1, HIDDEN), const),                # b2
            pl.BlockSpec((HIDDEN, act_dim), const),          # w3
            pl.BlockSpec((1, act_dim), const),               # b3
        ],
        out_specs=pl.BlockSpec((tb, act_dim), lambda i: (i, 0)),
        compiler_params=pltpu.CompilerParams(
            dimension_semantics=("parallel",)),
        cost_estimate=_mlp_cost(batch, obs_dim, act_dim, n_models=1),
    )(obs, w1, b1, w2, b2, w3, b3)


@jax.jit
def ddqn_mlp_pallas_both(obs, w1s, b1s, w2s, b2s, w3s, b3s):
    """Fused online+target forward in ONE launch.

    Params are stacked on a leading model axis of size 2; grid axis 0 selects
    the model (marked "parallel" -> the two models map to v7x's two
    TensorCores).  Returns (q_online, q_target)."""
    batch, obs_dim = obs.shape
    act_dim = w3s.shape[2]
    tb = _pick_batch_tile(batch)
    grid = (2, pl.cdiv(batch, tb))
    wsel = lambda m, i: (m, 0, 0)   # per-model weight block, resident across i

    out = pl.pallas_call(
        _ddqn_mlp_kernel,
        out_shape=jax.ShapeDtypeStruct((2, batch, act_dim), jnp.float32),
        grid=grid,
        in_specs=[
            pl.BlockSpec((tb, obs_dim), lambda m, i: (i, 0)),   # shared obs tile
            pl.BlockSpec((None, obs_dim, HIDDEN), wsel),        # w1[model]
            pl.BlockSpec((None, 1, HIDDEN), wsel),              # b1[model]
            pl.BlockSpec((None, HIDDEN, HIDDEN), wsel),         # w2[model]
            pl.BlockSpec((None, 1, HIDDEN), wsel),              # b2[model]
            pl.BlockSpec((None, HIDDEN, act_dim), wsel),        # w3[model]
            pl.BlockSpec((None, 1, act_dim), wsel),             # b3[model]
        ],
        out_specs=pl.BlockSpec((None, tb, act_dim), lambda m, i: (m, i, 0)),
        compiler_params=pltpu.CompilerParams(
            dimension_semantics=("parallel", "parallel")),
        cost_estimate=_mlp_cost(batch, obs_dim, act_dim, n_models=2),
    )(obs, w1s, b1s, w2s, b2s, w3s, b3s)
    return out[0], out[1]


def init_linear(key, fan_in, fan_out):
    """Deterministic init mimicking torch.nn.Linear default (kaiming-uniform)."""
    kw, kb = jax.random.split(key)
    bound = 1.0 / jnp.sqrt(jnp.float32(fan_in))
    # Stored (in, out) so the kernel computes x @ W (== x @ W_torch.T).
    w = jax.random.uniform(kw, (fan_in, fan_out), jnp.float32, -bound, bound)
    b = jax.random.uniform(kb, (1, fan_out), jnp.float32, -bound, bound)
    return w, b


def _prepare_params(w1, b1, w2, b2, w3, b3):
    """One-time dtype prep: weights bf16, biases f32.  No padding needed."""
    return (w1.astype(jnp.bfloat16), b1.astype(jnp.float32),
            w2.astype(jnp.bfloat16), b2.astype(jnp.float32),
            w3.astype(jnp.bfloat16), b3.astype(jnp.float32))


class DDQNPallas:
    def __init__(self, observation_dim, action_dim, key):
        self.action_dim = action_dim
        k1, k2, k3 = jax.random.split(key, 3)
        w1, b1 = init_linear(k1, observation_dim, HIDDEN)
        w2, b2 = init_linear(k2, HIDDEN, HIDDEN)
        w3, b3 = init_linear(k3, HIDDEN, action_dim)
        online_raw = (w1, b1, w2, b2, w3, b3)
        # target.load_state_dict(online.state_dict()) -> exact copy.
        target_raw = tuple(jnp.array(p) for p in online_raw)
        self.online = _prepare_params(*online_raw)
        self.target = _prepare_params(*target_raw)
        # Stacked param set for the fused online+target launch.
        self.stacked = tuple(jnp.stack([po, pt])
                             for po, pt in zip(self.online, self.target))

    def forward(self, obs, model):
        if model == MODEL_ONLINE:
            params = self.online
        elif model == MODEL_TARGET:
            params = self.target
        else:
            raise ValueError("model must be MODEL_ONLINE or MODEL_TARGET")
        return ddqn_mlp_pallas(obs, *params)

    def forward_both(self, obs):
        """Evaluate online(obs) and target(obs) in a single fused launch."""
        return ddqn_mlp_pallas_both(obs, *self.stacked)


def _reference_forward(obs, params):
    """Pure-JAX reference using the same bf16 params / f32 accumulation."""
    w1, b1, w2, b2, w3, b3 = params
    x = obs.astype(jnp.bfloat16)
    h1 = jnp.maximum(
        jnp.dot(x, w1, preferred_element_type=jnp.float32) + b1, 0.0
    ).astype(jnp.bfloat16)
    h2 = jnp.maximum(
        jnp.dot(h1, w2, preferred_element_type=jnp.float32) + b2, 0.0
    ).astype(jnp.bfloat16)
    return jnp.dot(h2, w3, preferred_element_type=jnp.float32) + b3


if __name__ == "__main__":
    key = jax.random.PRNGKey(0)
    k_param, k_obs = jax.random.split(key)

    batch = 32
    observation_dim = 16
    action_dim = 4

    net = DDQNPallas(observation_dim, action_dim, k_param)
    obs = jax.random.normal(k_obs, (batch, observation_dim), jnp.float32)

    # Original-module semantics: one model per call.
    q_online = net.forward(obs, MODEL_ONLINE)
    q_target = net.forward(obs, MODEL_TARGET)
    jax.block_until_ready(q_online)
    jax.block_until_ready(q_target)

    # Fused online+target launch (training-step fast path).
    q_on_f, q_tg_f = net.forward_both(obs)
    jax.block_until_ready(q_on_f)
    jax.block_until_ready(q_tg_f)

    ref = _reference_forward(obs, net.online)
    assert q_online.shape == (batch, action_dim)
    assert q_target.shape == (batch, action_dim)
    assert jnp.allclose(q_online, ref, atol=2e-2, rtol=2e-2)
    assert jnp.allclose(q_target, q_online, atol=1e-6)      # target == online copy
    assert jnp.allclose(q_on_f, q_online, atol=1e-6)        # fused == per-model
    assert jnp.allclose(q_tg_f, q_target, atol=1e-6)

    print("KERNEL_OK")
</pallas_src>

<mosaic_0001>
module attributes {stable_mosaic.version = 11 : i64} {
  func.func @_ddqn_mlp_kernel(%arg0: i32, %arg1: memref<16x16xf32, #tpu.memory_space<vmem>>, %arg2: memref<16x256xbf16, #tpu.memory_space<vmem>>, %arg3: memref<1x256xf32, #tpu.memory_space<vmem>>, %arg4: memref<256x256xbf16, #tpu.memory_space<vmem>>, %arg5: memref<1x256xf32, #tpu.memory_space<vmem>>, %arg6: memref<256x4xbf16, #tpu.memory_space<vmem>>, %arg7: memref<1x4xf32, #tpu.memory_space<vmem>>, %arg8: memref<16x4xf32, #tpu.memory_space<vmem>>) attributes {dimension_semantics = [#tpu.dimension_semantics<parallel>], iteration_bounds = array<i64: 2>, scalar_prefetch = 0 : i64, scratch_operands = 0 : i64, tpu.core_type = #tpu.core_type<tc>, window_params = [{transform_indices = @transform_0, window_bounds = array<i64: 16, 16>}, {pipeline_mode = #tpu.pipeline_mode<synchronous>, transform_indices = @transform_1, window_bounds = array<i64: 16, 256>}, {pipeline_mode = #tpu.pipeline_mode<synchronous>, transform_indices = @transform_2, window_bounds = array<i64: 1, 256>}, {pipeline_mode = #tpu.pipeline_mode<synchronous>, transform_indices = @transform_3, window_bounds = array<i64: 256, 256>}, {pipeline_mode = #tpu.pipeline_mode<synchronous>, transform_indices = @transform_4, window_bounds = array<i64: 1, 256>}, {pipeline_mode = #tpu.pipeline_mode<synchronous>, transform_indices = @transform_5, window_bounds = array<i64: 256, 4>}, {pipeline_mode = #tpu.pipeline_mode<synchronous>, transform_indices = @transform_6, window_bounds = array<i64: 1, 4>}, {transform_indices = @transform_7, window_bounds = array<i64: 16, 4>}]} {
    %c0 = arith.constant 0 : index
    %c0_0 = arith.constant 0 : index
    %0 = vector.load %arg1[%c0, %c0_0] : memref<16x16xf32, #tpu.memory_space<vmem>>, vector<16x16xf32>
    %1 = arith.truncf %0 : vector<16x16xf32> to vector<16x16xbf16>
    %c0_1 = arith.constant 0 : index
    %c0_2 = arith.constant 0 : index
    %2 = vector.load %arg2[%c0_1, %c0_2] : memref<16x256xbf16, #tpu.memory_space<vmem>>, vector<16x256xbf16>
    %cst = arith.constant dense<0.000000e+00> : vector<16x256xf32>
    %3 = tpu.matmul %1, %2, %cst {dimension_numbers = #tpu.dot_dimension_numbers<[1], [0], [0], [1], [0, 0, 1, 1], [], []>} : vector<16x16xbf16>, vector<16x256xbf16>, vector<16x256xf32> -> vector<16x256xf32>
    %c0_3 = arith.constant 0 : index
    %c0_4 = arith.constant 0 : index
    %4 = vector.load %arg3[%c0_3, %c0_4] : memref<1x256xf32, #tpu.memory_space<vmem>>, vector<1x256xf32>
    %5 = vector.broadcast %4 : vector<1x256xf32> to vector<16x256xf32>
    %6 = arith.addf %3, %5 : vector<16x256xf32>
    %cst_5 = arith.constant 0.000000e+00 : f32
    %7 = vector.broadcast %cst_5 : f32 to vector<16x256xf32>
    %8 = arith.maximumf %6, %7 : vector<16x256xf32>
    %9 = arith.truncf %8 : vector<16x256xf32> to vector<16x256xbf16>
    %c0_6 = arith.constant 0 : index
    %c0_7 = arith.constant 0 : index
    %10 = vector.load %arg4[%c0_6, %c0_7] : memref<256x256xbf16, #tpu.memory_space<vmem>>, vector<256x256xbf16>
    %cst_8 = arith.constant dense<0.000000e+00> : vector<16x256xf32>
    %11 = tpu.matmul %9, %10, %cst_8 {dimension_numbers = #tpu.dot_dimension_numbers<[1], [0], [0], [1], [0, 0, 1, 1], [], []>} : vector<16x256xbf16>, vector<256x256xbf16>, vector<16x256xf32> -> vector<16x256xf32>
    %c0_9 = arith.constant 0 : index
    %c0_10 = arith.constant 0 : index
    %12 = vector.load %arg5[%c0_9, %c0_10] : memref<1x256xf32, #tpu.memory_space<vmem>>, vector<1x256xf32>
    %13 = vector.broadcast %12 : vector<1x256xf32> to vector<16x256xf32>
    %14 = arith.addf %11, %13 : vector<16x256xf32>
    %cst_11 = arith.constant 0.000000e+00 : f32
    %15 = vector.broadcast %cst_11 : f32 to vector<16x256xf32>
    %16 = arith.maximumf %14, %15 : vector<16x256xf32>
    %17 = arith.truncf %16 : vector<16x256xf32> to vector<16x256xbf16>
    %c0_12 = arith.constant 0 : index
    %c0_13 = arith.constant 0 : index
    %18 = vector.load %arg6[%c0_12, %c0_13] : memref<256x4xbf16, #tpu.memory_space<vmem>>, vector<256x4xbf16>
    %cst_14 = arith.constant dense<0.000000e+00> : vector<16x4xf32>
    %19 = tpu.matmul %17, %18, %cst_14 {dimension_numbers = #tpu.dot_dimension_numbers<[1], [0], [0], [1], [0, 0, 1, 1], [], []>} : vector<16x256xbf16>, vector<256x4xbf16>, vector<16x4xf32> -> vector<16x4xf32>
    %c0_15 = arith.constant 0 : index
    %c0_16 = arith.constant 0 : index
    %20 = vector.load %arg7[%c0_15, %c0_16] : memref<1x4xf32, #tpu.memory_space<vmem>>, vector<1x4xf32>
    %21 = vector.broadcast %20 : vector<1x4xf32> to vector<16x4xf32>
    %22 = arith.addf %19, %21 : vector<16x4xf32>
    %c0_17 = arith.constant 0 : index
    %c0_18 = arith.constant 0 : index
    %23 = vector.load %arg8[%c0_17, %c0_18] : memref<16x4xf32, #tpu.memory_space<vmem>>, vector<16x4xf32>
    tpu.vector_store %arg8[%c0_17, %c0_18], %22 {strides = array<i32>} : memref<16x4xf32, #tpu.memory_space<vmem>>, vector<16x4xf32>,
    return
  }
  func.func @transform_0(%arg0: i32) -> (i32, i32) {
    %c0_i32 = arith.constant 0 : i32
    %c0_i32_0 = arith.constant 0 : i32
    return %arg0, %c0_i32 : i32, i32
  }
  func.func @transform_1(%arg0: i32) -> (i32, i32) {
    %c0_i32 = arith.constant 0 : i32
    %c0_i32_0 = arith.constant 0 : i32
    %c0_i32_1 = arith.constant 0 : i32
    return %c0_i32, %c0_i32_0 : i32, i32
  }
  func.func @transform_2(%arg0: i32) -> (i32, i32) {
    %c0_i32 = arith.constant 0 : i32
    %c0_i32_0 = arith.constant 0 : i32
    %c0_i32_1 = arith.constant 0 : i32
    return %c0_i32, %c0_i32_0 : i32, i32
  }
  func.func @transform_3(%arg0: i32) -> (i32, i32) {
    %c0_i32 = arith.constant 0 : i32
    %c0_i32_0 = arith.constant 0 : i32
    %c0_i32_1 = arith.constant 0 : i32
    return %c0_i32, %c0_i32_0 : i32, i32
  }
  func.func @transform_4(%arg0: i32) -> (i32, i32) {
    %c0_i32 = arith.constant 0 : i32
    %c0_i32_0 = arith.constant 0 : i32
    %c0_i32_1 = arith.constant 0 : i32
    return %c0_i32, %c0_i32_0 : i32, i32
  }
  func.func @transform_5(%arg0: i32) -> (i32, i32) {
    %c0_i32 = arith.constant 0 : i32
    %c0_i32_0 = arith.constant 0 : i32
    %c0_i32_1 = arith.constant 0 : i32
    return %c0_i32, %c0_i32_0 : i32, i32
  }
  func.func @transform_6(%arg0: i32) -> (i32, i32) {
    %c0_i32 = arith.constant 0 : i32
    %c0_i32_0 = arith.constant 0 : i32
    %c0_i32_1 = arith.constant 0 : i32
    return %c0_i32, %c0_i32_0 : i32, i32
  }
  func.func @transform_7(%arg0: i32) -> (i32, i32) {
    %c0_i32 = arith.constant 0 : i32
    %c0_i32_0 = arith.constant 0 : i32
    return %arg0, %c0_i32 : i32, i32
  }
}

</mosaic_0001>

<llo_original>
// kernel: ddqn_mlp_pallas.1
$region0: #{ddqn_mlp_pallas.1}
  #allocation0 [shape = 'u32[]', space=smem, size = 0x4, offset = 0x4, fixed_abs, tag = 'smem constant byte address 0x4 - core index']
  #allocation1 [shape = 'u32[144,128]{1,0:T(1,128)}', space=vmem, size = 0x12000, scoped, tag = 'internal scratch']
  %s0 = inlined_call_operand.vmem [shape: f32[32,16], index: 0, kind: input, shape index: {}]
  %s1 = inlined_call_operand.vmem [shape: bf16[16,256], index: 1, kind: input, shape index: {}]
  %s2 = inlined_call_operand.vmem [shape: f32[1,256], index: 2, kind: input, shape index: {}]
  %s3 = inlined_call_operand.hbm [shape: bf16[256,256], index: 3, kind: input, shape index: {}]
  %s4 = inlined_call_operand.vmem [shape: f32[1,256], index: 4, kind: input, shape index: {}]
  %s5 = inlined_call_operand.vmem [shape: bf16[256,4], index: 5, kind: input, shape index: {}]
  %s6 = inlined_call_operand.vmem [shape: f32[1,4], index: 6, kind: input, shape index: {}]
  %s7 = inlined_call_operand.vmem [shape: f32[32,4], index: 7, kind: output, shape index: {}]
  %s8 = sld [smem:[#allocation0]]
  $region65: #{ddqn_mlp_pallas.1} parent=0
    _
  %s10 = ssub.s32 1, %s8
  %s11 = scalar_select 0, %s10, %s8
  $region1: #{ddqn_mlp_pallas.1} parent=0
    #allocation2 [shape = 'u8[131072]{0}', space=vmem, size = 0x20000, scoped, tag = 'input window, operand 3, single buffered']
    #allocation3 [shape = 's32[2]{0}', space=sflag, size = 0x8, scoped, tag = 'scoped memory for ddqn_mlp_pallas.1']
    %12 = vsyncpa [#allocation3], 0
    loop: start=0, step=1, limit=4
    $region2: #{ddqn_mlp_pallas.1} parent=1 // loop_pre_header
      _
    $region3: #{ddqn_mlp_pallas.1} parent=1 // loop_header
      %s14 = sphi 0, %s18
      %p15 = scmp.ge.s32.totalorder %s14, 4
      %s24 = sphi 0, %s26
      %s27 = sphi 0, %s24
      %s28 = sphi 0, %s27
      %s44 = sphi 0, %s28
      %s48 = sphi 0, %s48
      %s50 = sphi 0, %s48
      %s51 = sphi 0, %s50
      %s65 = sphi 0, %s51
      %s69 = sphi 0, %s69
      %s71 = sphi 0, %s69
      %s72 = sphi 0, %s71
      %s86 = sphi 0, %s72
      %s90 = sphi 0, %s90
      %s92 = sphi 0, %s90
      %s93 = sphi 0, %s92
      %s107 = sphi 0, %s93
      %s111 = sphi 0, %s111
      %s113 = sphi 0, %s111
      %s114 = sphi 0, %s113
      %s128 = sphi 0, %s114
      %s132 = sphi 0, %s132
      %s134 = sphi 0, %s132
      %s135 = sphi 0, %s134
      %s149 = sphi 0, %s135
      %s153 = sphi 0, %s153
      %s155 = sphi 0, %s153
      %s156 = sphi 0, %s155
      %s170 = sphi 0, %s156
      %s176 = sphi 0, %s178
      %s179 = sphi 0, %s176
      %s180 = sphi 0, %s179
      %s196 = sphi 0, %s180
    $region4: #{ddqn_mlp_pallas.1} parent=1 // loop_header_branch
      %17 = sbr.rel (%p15) target = $region8
    $region5: #{ddqn_mlp_pallas.1} parent=1 // loop_body
      %s19 = ssub.s32 %s14, 1
      %s20 = ssub.s32 %s14, 2
      %s21 = sadd.s32 %s14, 1
      %s22 = ssub.s32 %s14, %s21
      %p23 = scmp.eq.s32.totalorder %s22, 0
      %s25 = sadd.s32 %s24, 1
      %s26 = scalar_select %p23, %s24, %s25
      %p29 = pneg %p23
      %p30 = scmp.eq.s32.totalorder %s14, 1
      %p31 = por %p29, %p30
      %p32 = scmp.ne.s32.totalorder %s24, %s27
      %p33 = scmp.eq.s32.totalorder %s14, 0
      %p34 = por %p32, %p33
      %p35 = scmp.ne.s32.totalorder %s24, %s27
      %p36 = scmp.eq.s32.totalorder %s19, 1
      %p37 = por %p35, %p36
      %p38 = scmp.ne.s32.totalorder %s27, %s28
      %p39 = scmp.eq.s32.totalorder %s19, 0
      %p40 = por %p38, %p39
      %p41 = scmp.ne.s32.totalorder %s27, %s28
      %p42 = scmp.eq.s32.totalorder %s20, 1
      %p43 = por %p41, %p42
      %p45 = scmp.ne.s32.totalorder %s28, %s44
      %p46 = scmp.eq.s32.totalorder %s20, 0
      %p47 = por %p45, %p46
      %s49 = sadd.s32 %s48, 1
      %p52 = scmp.eq.s32.totalorder %s14, 1
      %p53 = scmp.ne.s32.totalorder %s48, %s50
      %p54 = scmp.eq.s32.totalorder %s14, 0
      %p55 = por %p53, %p54
      %p56 = scmp.ne.s32.totalorder %s48, %s50
      %p57 = scmp.eq.s32.totalorder %s19, 1
      %p58 = por %p56, %p57
      %p59 = scmp.ne.s32.totalorder %s50, %s51
      %p60 = scmp.eq.s32.totalorder %s19, 0
      %p61 = por %p59, %p60
      %p62 = scmp.ne.s32.totalorder %s50, %s51
      %p63 = scmp.eq.s32.totalorder %s20, 1
      %p64 = por %p62, %p63
      %p66 = scmp.ne.s32.totalorder %s51, %s65
      %p67 = scmp.eq.s32.totalorder %s20, 0
      %p68 = por %p66, %p67
      %s70 = sadd.s32 %s69, 1
      %p73 = scmp.eq.s32.totalorder %s14, 1
      %p74 = scmp.ne.s32.totalorder %s69, %s71
      %p75 = scmp.eq.s32.totalorder %s14, 0
      %p76 = por %p74, %p75
      %p77 = scmp.ne.s32.totalorder %s69, %s71
      %p78 = scmp.eq.s32.totalorder %s19, 1
      %p79 = por %p77, %p78
      %p80 = scmp.ne.s32.totalorder %s71, %s72
      %p81 = scmp.eq.s32.totalorder %s19, 0
      %p82 = por %p80, %p81
      %p83 = scmp.ne.s32.totalorder %s71, %s72
      %p84 = scmp.eq.s32.totalorder %s20, 1
      %p85 = por %p83, %p84
      %p87 = scmp.ne.s32.totalorder %s72, %s86
      %p88 = scmp.eq.s32.totalorder %s20, 0
      %p89 = por %p87, %p88
      %s91 = sadd.s32 %s90, 1
      %p94 = scmp.eq.s32.totalorder %s14, 1
      %p95 = scmp.ne.s32.totalorder %s90, %s92
      %p96 = scmp.eq.s32.totalorder %s14, 0
      %p97 = por %p95, %p96
      %p98 = scmp.ne.s32.totalorder %s90, %s92
      %p99 = scmp.eq.s32.totalorder %s19, 1
      %p100 = por %p98, %p99
      %p101 = scmp.ne.s32.totalorder %s92, %s93
      %p102 = scmp.eq.s32.totalorder %s19, 0
      %p103 = por %p101, %p102
      %p104 = scmp.ne.s32.totalorder %s92, %s93
      %p105 = scmp.eq.s32.totalorder %s20, 1
      %p106 = por %p104, %p105
      %p108 = scmp.ne.s32.totalorder %s93, %s107
      %p109 = scmp.eq.s32.totalorder %s20, 0
      %p110 = por %p108, %p109
      %s112 = sadd.s32 %s111, 1
      %p115 = scmp.eq.s32.totalorder %s14, 1
      %p116 = scmp.ne.s32.totalorder %s111, %s113
      %p117 = scmp.eq.s32.totalorder %s14, 0
      %p118 = por %p116, %p117
      %p119 = scmp.ne.s32.totalorder %s111, %s113
      %p120 = scmp.eq.s32.totalorder %s19, 1
      %p121 = por %p119, %p120
      %p122 = scmp.ne.s32.totalorder %s113, %s114
      %p123 = scmp.eq.s32.totalorder %s19, 0
      %p124 = por %p122, %p123
      %p125 = scmp.ne.s32.totalorder %s113, %s114
      %p126 = scmp.eq.s32.totalorder %s20, 1
      %p127 = por %p125, %p126
      %p129 = scmp.ne.s32.totalorder %s114, %s128
      %p130 = scmp.eq.s32.totalorder %s20, 0
      %p131 = por %p129, %p130
      %s133 = sadd.s32 %s132, 1
      %p136 = scmp.eq.s32.totalorder %s14, 1
      %p137 = scmp.ne.s32.totalorder %s132, %s134
      %p138 = scmp.eq.s32.totalorder %s14, 0
      %p139 = por %p137, %p138
      %p140 = scmp.ne.s32.totalorder %s132, %s134
      %p141 = scmp.eq.s32.totalorder %s19, 1
      %p142 = por %p140, %p141
      %p143 = scmp.ne.s32.totalorder %s134, %s135
      %p144 = scmp.eq.s32.totalorder %s19, 0
      %p145 = por %p143, %p144
      %p146 = scmp.ne.s32.totalorder %s134, %s135
      %p147 = scmp.eq.s32.totalorder %s20, 1
      %p148 = por %p146, %p147
      %p150 = scmp.ne.s32.totalorder %s135, %s149
      %p151 = scmp.eq.s32.totalorder %s20, 0
      %p152 = por %p150, %p151
      %s154 = sadd.s32 %s153, 1
      %p157 = scmp.eq.s32.totalorder %s14, 1
      %p158 = scmp.ne.s32.totalorder %s153, %s155
      %p159 = scmp.eq.s32.totalorder %s14, 0
      %p160 = por %p158, %p159
      %p161 = scmp.ne.s32.totalorder %s153, %s155
      %p162 = scmp.eq.s32.totalorder %s19, 1
      %p163 = por %p161, %p162
      %p164 = scmp.ne.s32.totalorder %s155, %s156
      %p165 = scmp.eq.s32.totalorder %s19, 0
      %p166 = por %p164, %p165
      %p167 = scmp.ne.s32.totalorder %s155, %s156
      %p168 = scmp.eq.s32.totalorder %s20, 1
      %p169 = por %p167, %p168
      %p171 = scmp.ne.s32.totalorder %s156, %s170
      %p172 = scmp.eq.s32.totalorder %s20, 0
      %p173 = por %p171, %p172
      %s174 = ssub.s32 %s14, %s21
      %p175 = scmp.eq.s32.totalorder %s174, 0
      %s177 = sadd.s32 %s176, 1
      %s178 = scalar_select %p175, %s176, %s177
      %p181 = pneg %p175
      %p182 = scmp.eq.s32.totalorder %s14, 1
      %p183 = por %p181, %p182
      %p184 = scmp.ne.s32.totalorder %s176, %s179
      %p185 = scmp.eq.s32.totalorder %s14, 0
      %p186 = por %p184, %p185
      %p187 = scmp.ne.s32.totalorder %s176, %s179
      %p188 = scmp.eq.s32.totalorder %s19, 1
      %p189 = por %p187, %p188
      %p190 = scmp.ne.s32.totalorder %s179, %s180
      %p191 = scmp.eq.s32.totalorder %s19, 0
      %p192 = por %p190, %p191
      %p193 = scmp.ne.s32.totalorder %s179, %s180
      %p194 = scmp.eq.s32.totalorder %s20, 1
      %p195 = por %p193, %p194
      %p197 = scmp.ne.s32.totalorder %s180, %s196
      %p198 = scmp.eq.s32.totalorder %s20, 0
      %p199 = por %p197, %p198
      %p200 = scmp.le.s32.totalorder 1, %s14
      %p201 = scmp.lt.s32.totalorder %s14, 3
      %p202 = pnand %p200, %p201
      %p203 = pneg %p202
      // Predicated region
      $region9: #{ddqn_mlp_pallas.1} parent=5 // pred_check
        _
      $region10: #{ddqn_mlp_pallas.1} parent=5 // pred_check_branch
        %205 = sbr.rel (%p202) target = $region12
      $region11: #{ddqn_mlp_pallas.1} parent=5 // pred_region
        %s206 = ssub.s32 %s14, 1
        // Predicated region
        $region13: #{ddqn_mlp_pallas.1} parent=11 // pred_check
          %p207 = pneg %p61
        $region14: #{ddqn_mlp_pallas.1} parent=11 // pred_check_branch
          %209 = sbr.rel (%p207) target = $region16
        $region15: #{ddqn_mlp_pallas.1} parent=11 // pred_region
          _
        $region16: #{ddqn_mlp_pallas.1} parent=11 // pred_fallthru
          _
        // Predicated region
        $region17: #{ddqn_mlp_pallas.1} parent=11 // pred_check
          %p210 = pneg %p82
        $region18: #{ddqn_mlp_pallas.1} parent=11 // pred_check_branch
          %212 = sbr.rel (%p210) target = $region20
        $region19: #{ddqn_mlp_pallas.1} parent=11 // pred_region
          _
        $region20: #{ddqn_mlp_pallas.1} parent=11 // pred_fallthru
          _
        // Predicated region
        $region21: #{ddqn_mlp_pallas.1} parent=11 // pred_check
          %p213 = pneg %p103
        $region22: #{ddqn_mlp_pallas.1} parent=11 // pred_check_branch
          %215 = sbr.rel (%p213) target = $region24
        $region23: #{ddqn_mlp_pallas.1} parent=11 // pred_region
          %s217 = ssub.s32 4096, 4096
          %218 = vsyncadd [#allocation3], %s217
          %s219 = sshll.u32 [#allocation2], 4
          %s220 = int_to_ptr.vmem [resolvable:$true] %s219
          %225 = dma.hbm_to_vmem [thread:$0]  %s3, 4096, %s220, [#allocation3], 128, 128, 8
        $region24: #{ddqn_mlp_pallas.1} parent=11 // pred_fallthru
          _
        // Predicated region
        $region25: #{ddqn_mlp_pallas.1} parent=11 // pred_check
          %p226 = pneg %p124
        $region26: #{ddqn_mlp_pallas.1} parent=11 // pred_check_branch
          %228 = sbr.rel (%p226) target = $region28
        $region27: #{ddqn_mlp_pallas.1} parent=11 // pred_region
          _
        $region28: #{ddqn_mlp_pallas.1} parent=11 // pred_fallthru
          _
        // Predicated region
        $region29: #{ddqn_mlp_pallas.1} parent=11 // pred_check
          %p229 = pneg %p145
        $region30: #{ddqn_mlp_pallas.1} parent=11 // pred_check_branch
          %231 = sbr.rel (%p229) target = $region32
        $region31: #{ddqn_mlp_pallas.1} parent=11 // pred_region
          _
        $region32: #{ddqn_mlp_pallas.1} parent=11 // pred_fallthru
          _
        // Predicated region
        $region33: #{ddqn_mlp_pallas.1} parent=11 // pred_check
          %p232 = pneg %p166
        $region34: #{ddqn_mlp_pallas.1} parent=11 // pred_check_branch
          %234 = sbr.rel (%p232) target = $region36
        $region35: #{ddqn_mlp_pallas.1} parent=11 // pred_region
          _
        $region36: #{ddqn_mlp_pallas.1} parent=11 // pred_fallthru
          _
      $region12: #{ddqn_mlp_pallas.1} parent=5 // pred_fallthru
        _
      %p235 = scmp.lt.s32.totalorder %s14, 2
      // Predicated region
      $region37: #{ddqn_mlp_pallas.1} parent=5 // pred_check
        %p236 = pneg %p235
      $region38: #{ddqn_mlp_pallas.1} parent=5 // pred_check_branch
        %238 = sbr.rel (%p236) target = $region40
      $region39: #{ddqn_mlp_pallas.1} parent=5 // pred_region
        // Predicated region
        $region41: #{ddqn_mlp_pallas.1} parent=39 // pred_check
          %p239 = pneg %p34
        $region42: #{ddqn_mlp_pallas.1} parent=39 // pred_check_branch
          %241 = sbr.rel (%p239) target = $region44
        $region43: #{ddqn_mlp_pallas.1} parent=39 // pred_region
          %s242 = smul.u32 2, %s14
          %p243 = scmp.lt.s32.totalorder %s242, 3
          %s244 = scalar_select %p243, %s242, 3
          %s245 = smul.addr %s244, 8
          %s246 = scalar_lea.vmem %s0, %s245
          %s247 = smul.u32 2, %s14
        $region44: #{ddqn_mlp_pallas.1} parent=39 // pred_fallthru
          _
      $region40: #{ddqn_mlp_pallas.1} parent=5 // pred_fallthru
        _
      %p248 = scmp.le.s32.totalorder 1, %s14
      %p249 = scmp.lt.s32.totalorder %s14, 3
      %p250 = pnand %p248, %p249
      %p251 = pneg %p250
      // Predicated region
      $region45: #{ddqn_mlp_pallas.1} parent=5 // pred_check
        _
      $region46: #{ddqn_mlp_pallas.1} parent=5 // pred_check_branch
        %253 = sbr.rel (%p250) target = $region48
      $region47: #{ddqn_mlp_pallas.1} parent=5 // pred_region
        %s254 = ssub.s32 %s14, 1
        // Predicated region
        $region49: #{ddqn_mlp_pallas.1} parent=47 // pred_check
          %p255 = pneg %p103
        $region50: #{ddqn_mlp_pallas.1} parent=47 // pred_check_branch
          %257 = sbr.rel (%p255) target = $region52
        $region51: #{ddqn_mlp_pallas.1} parent=47 // pred_region
          %258 = dma.done [#allocation3], 4096
        $region52: #{ddqn_mlp_pallas.1} parent=47 // pred_fallthru
          _
        %s259 = smul.u32 2, %s19
        %p260 = scmp.lt.s32.totalorder %s259, 3
        %s261 = scalar_select %p260, %s259, 3
        %s262 = smul.addr %s261, 8
        %s263 = scalar_lea.vmem %s0, %s262
        %p264 = pneg %p40
        %p265 = pneg %p37
        %p266 = pneg %p61
        %p267 = pneg %p58
        %p268 = pneg %p82
        %p269 = pneg %p79
        %p270 = pneg %p103
        %p271 = pneg %p100
        %p272 = pneg %p124
        %p273 = pneg %p121
        %p274 = pneg %p145
        %p275 = pneg %p142
        %p276 = pneg %p166
        %p277 = pneg %p163
        %p278 = pneg %p192
        %p279 = pneg %p189
        %s280 = smul.u32 2, %s19
        %p281 = scmp.lt.s32.totalorder %s280, 3
        %s282 = scalar_select %p281, %s280, 3
        %s283 = smul.addr %s282, 8
        %s284 = scalar_lea.vmem %s7, %s283
        %s285 = smul.u32 2, %s19
        %p286 = scmp.lt.s32.totalorder %s285, 3
        %s287 = scalar_select %p286, %s285, 3
        %s288 = smul.addr %s287, 8
        %s289 = scalar_lea.vmem %s0, %s288
        %s290 = smul.u32 2, %s19
        %s291 = smul.u32 2, %s19
        %p292 = scmp.lt.s32.totalorder %s291, 3
        %s293 = scalar_select %p292, %s291, 3
        %s294 = smul.addr %s293, 8
        %s295 = scalar_lea.vmem %s7, %s294
        %s296 = smul.u32 2, %s19
        %v298 = vld [vmem:[%s289] sm:$0xff]
        %v299 = vld [vmem:[%s289 + $0x8] sm:$0xff]
        %v300 = vpack.c.bf16 %v299, %v298
        %v301 = vld [vmem:[%s1] sm:$0xff]
        %v302 = vld [vmem:[%s1 + $0x8] sm:$0xff]
        %v303 = vld [vmem:[%s2] sm:$0x3]
        %v305 = vlaneseq
        %v306 = vshrl.u32 %v305, 7
        %v307 = vsub.s32 0, %v306
        %v308 = vrot.slane %v303, %v307
        %v309 = vlaneseq
        %v310 = vshrl.u32 %v309, 7
        %v311 = vsub.s32 1, %v310
        %v312 = vrot.slane %v303, %v311
        %v317 = vunpack.c.l.b16 %v301
        %v318 = vunpack.c.h.b16 %v301
        %v319 = vunpack.c.l.b16 %v302
        %v320 = vunpack.c.h.b16 %v302
        %v321 = vpack.c.b16 %v319, %v317
        %v322 = vpack.c.b16 %v320, %v318
        %vm325 = vcmask 130048
        %v327 = vsel %vm325, %v300, 0
        %329 = vmatprep.subr.bf16.mxu0 0
        %330 = vmatpush1.bf16.msra.mxu0 0
        %331 = vmatprep.subr.bf16.mxu0 0
        %332 = vmatpush1.bf16.msra.mxu0 0
        %333 = vmatprep.subr.bf16.mxu0 0
        %334 = vmatpush1.bf16.msra.mxu0 0
        %335 = vmatprep.subr.bf16.mxu0 0
        %336 = vmatpush1.bf16.msra.mxu0 0
        %337 = vmatprep.subr.bf16.mxu0 0
        %338 = vmatpush1.bf16.msra.mxu0 0
        %339 = vmatprep.subr.bf16.mxu0 0
        %340 = vmatpush1.bf16.msra.mxu0 0
        %341 = vmatprep.subr.bf16.mxu0 0
        %342 = vmatpush1.bf16.msra.mxu0 0
        %343 = vmatprep.subr.bf16.mxu0 %v322
        %344 = vmatpush1.bf16.msra.mxu0 %v321
        %345 = vmatprep.subr.bf16.mxu0 0
        %346 = vmatpush2.bf16.msra.mxu0 0
        %347 = vmatprep.subr.bf16.mxu0 0
        %348 = vmatpush2.bf16.msra.mxu0 0
        %349 = vmatprep.subr.bf16.mxu0 0
        %350 = vmatpush2.bf16.msra.mxu0 0
        %351 = vmatprep.subr.bf16.mxu0 0
        %352 = vmatpush2.bf16.msra.mxu0 0
        %353 = vmatprep.subr.bf16.mxu0 0
        %354 = vmatpush2.bf16.msra.mxu0 0
        %355 = vmatprep.subr.bf16.mxu0 0
        %356 = vmatpush2.bf16.msra.mxu0 0
        %357 = vmatprep.subr.bf16.mxu0 0
        %358 = vmatpush2.bf16.msra.mxu0 0
        %359 = vmatprep.subr.bf16.mxu0 0
        %360 = vmatpush2.bf16.msra.mxu0 0
        %361 = vmatprep.mubr.bf16.mxu0 0
        %362 = vmatmul.mubr.bf16.gmra.mxu0 %v327
        %v363 = vpop.f32.mrf.mxu0
        %v364 = vadd.f32 %v308, %v363
        %v365 = vpop.f32.mrf.mxu0
        %v366 = vadd.f32 %v312, %v365
        %v367 = vpop.f32.mrf.mxu0
        %v368 = vadd.f32 %v308, %v367
        %v369 = vpop.f32.mrf.mxu0
        %v370 = vadd.f32 %v312, %v369
        %371 = vdwg.mxu0
        %v372 = vmax.f32 %v364, 0.0
        %v373 = vmax.f32 %v366, 0.0
        %v374 = vmax.f32 %v368, 0.0
        %v375 = vmax.f32 %v370, 0.0
        %v376 = vpack.c.bf16 %v374, %v372
        %v377 = vpack.c.bf16 %v375, %v373
        %v378 = vld [vmem:[#allocation2] sm:$0xff]
        %v379 = vld [vmem:[#allocation2 + $0x8] sm:$0xff]
        %v380 = vld [vmem:[#allocation2 + $0x10] sm:$0xff]
        %v381 = vld [vmem:[#allocation2 + $0x18] sm:$0xff]
        %v382 = vld [vmem:[#allocation2 + $0x20] sm:$0xff]
        %v383 = vld [vmem:[#allocation2 + $0x28] sm:$0xff]
        %v384 = vld [vmem:[#allocation2 + $0x30] sm:$0xff]
        %v385 = vld [vmem:[#allocation2 + $0x38] sm:$0xff]
        %v386 = vld [vmem:[#allocation2 + $0x40] sm:$0xff]
        %v387 = vld [vmem:[#allocation2 + $0x48] sm:$0xff]
        %v388 = vld [vmem:[#allocation2 + $0x50] sm:$0xff]
        %v389 = vld [vmem:[#allocation2 + $0x58] sm:$0xff]
        %v390 = vld [vmem:[#allocation2 + $0x60] sm:$0xff]
        %v391 = vld [vmem:[#allocation2 + $0x68] sm:$0xff]
        %v392 = vld [vmem:[#allocation2 + $0x70] sm:$0xff]
        %v393 = vld [vmem:[#allocation2 + $0x78] sm:$0xff]
        %v394 = vld [vmem:[#allocation2 + $0x80] sm:$0xff]
        %v395 = vld [vmem:[#allocation2 + $0x88] sm:$0xff]
        %v396 = vld [vmem:[#allocation2 + $0x90] sm:$0xff]
        %v397 = vld [vmem:[#allocation2 + $0x98] sm:$0xff]
        %v398 = vld [vmem:[#allocation2 + $0xa0] sm:$0xff]
        %v399 = vld [vmem:[#allocation2 + $0xa8] sm:$0xff]
        %v400 = vld [vmem:[#allocation2 + $0xb0] sm:$0xff]
        %v401 = vld [vmem:[#allocation2 + $0xb8] sm:$0xff]
        %v402 = vld [vmem:[#allocation2 + $0xc0] sm:$0xff]
        %v403 = vld [vmem:[#allocation2 + $0xc8] sm:$0xff]
        %v404 = vld [vmem:[#allocation2 + $0xd0] sm:$0xff]
        %v405 = vld [vmem:[#allocation2 + $0xd8] sm:$0xff]
        %v406 = vld [vmem:[#allocation2 + $0xe0] sm:$0xff]
        %v407 = vld [vmem:[#allocation2 + $0xe8] sm:$0xff]
        %v408 = vld [vmem:[#allocation2 + $0xf0] sm:$0xff]
        %v409 = vld [vmem:[#allocation2 + $0xf8] sm:$0xff]
        %v410 = vld [vmem:[%s4] sm:$0x3]
        %v412 = vlaneseq
        %v413 = vshrl.u32 %v412, 7
        %v414 = vsub.s32 0, %v413
        %v415 = vrot.slane %v410, %v414
        %v416 = vlaneseq
        %v417 = vshrl.u32 %v416, 7
        %v418 = vsub.s32 1, %v417
        %v419 = vrot.slane %v410, %v418
        %v454 = vunpack.c.l.b16 %v378
        %v455 = vunpack.c.h.b16 %v378
        %v456 = vunpack.c.l.b16 %v379
        %v457 = vunpack.c.h.b16 %v379
        %v458 = vunpack.c.l.b16 %v380
        %v459 = vunpack.c.h.b16 %v380
        %v460 = vunpack.c.l.b16 %v381
        %v461 = vunpack.c.h.b16 %v381
        %v462 = vunpack.c.l.b16 %v382
        %v463 = vunpack.c.h.b16 %v382
        %v464 = vunpack.c.l.b16 %v383
        %v465 = vunpack.c.h.b16 %v383
        %v466 = vunpack.c.l.b16 %v384
        %v467 = vunpack.c.h.b16 %v384
        %v468 = vunpack.c.l.b16 %v385
        %v469 = vunpack.c.h.b16 %v385
        %v470 = vunpack.c.l.b16 %v386
        %v471 = vunpack.c.h.b16 %v386
        %v472 = vunpack.c.l.b16 %v387
        %v473 = vunpack.c.h.b16 %v387
        %v474 = vunpack.c.l.b16 %v388
        %v475 = vunpack.c.h.b16 %v388
        %v476 = vunpack.c.l.b16 %v389
        %v477 = vunpack.c.h.b16 %v389
        %v478 = vunpack.c.l.b16 %v390
        %v479 = vunpack.c.h.b16 %v390
        %v480 = vunpack.c.l.b16 %v391
        %v481 = vunpack.c.h.b16 %v391
        %v482 = vunpack.c.l.b16 %v392
        %v483 = vunpack.c.h.b16 %v392
        %v484 = vunpack.c.l.b16 %v393
        %v485 = vunpack.c.h.b16 %v393
        %v486 = vunpack.c.l.b16 %v394
        %v487 = vunpack.c.h.b16 %v394
        %v488 = vunpack.c.l.b16 %v395
        %v489 = vunpack.c.h.b16 %v395
        %v490 = vunpack.c.l.b16 %v396
        %v491 = vunpack.c.h.b16 %v396
        %v492 = vunpack.c.l.b16 %v397
        %v493 = vunpack.c.h.b16 %v397
        %v494 = vunpack.c.l.b16 %v398
        %v495 = vunpack.c.h.b16 %v398
        %v496 = vunpack.c.l.b16 %v399
        %v497 = vunpack.c.h.b16 %v399
        %v498 = vunpack.c.l.b16 %v400
        %v499 = vunpack.c.h.b16 %v400
        %v500 = vunpack.c.l.b16 %v401
        %v501 = vunpack.c.h.b16 %v401
        %v502 = vunpack.c.l.b16 %v402
        %v503 = vunpack.c.h.b16 %v402
        %v504 = vunpack.c.l.b16 %v403
        %v505 = vunpack.c.h.b16 %v403
        %v506 = vunpack.c.l.b16 %v404
        %v507 = vunpack.c.h.b16 %v404
        %v508 = vunpack.c.l.b16 %v405
        %v509 = vunpack.c.h.b16 %v405
        %v510 = vunpack.c.l.b16 %v406
        %v511 = vunpack.c.h.b16 %v406
        %v512 = vunpack.c.l.b16 %v407
        %v513 = vunpack.c.h.b16 %v407
        %v514 = vunpack.c.l.b16 %v408
        %v515 = vunpack.c.h.b16 %v408
        %v516 = vunpack.c.l.b16 %v409
        %v517 = vunpack.c.h.b16 %v409
        %v518 = vpack.c.b16 %v456, %v454
        %v519 = vpack.c.b16 %v457, %v455
        %v520 = vpack.c.b16 %v460, %v458
        %v521 = vpack.c.b16 %v461, %v459
        %v522 = vpack.c.b16 %v464, %v462
        %v523 = vpack.c.b16 %v465, %v463
        %v524 = vpack.c.b16 %v468, %v466
        %v525 = vpack.c.b16 %v469, %v467
        %v526 = vpack.c.b16 %v472, %v470
        %v527 = vpack.c.b16 %v473, %v471
        %v528 = vpack.c.b16 %v476, %v474
        %v529 = vpack.c.b16 %v477, %v475
        %v530 = vpack.c.b16 %v480, %v478
        %v531 = vpack.c.b16 %v481, %v479
        %v532 = vpack.c.b16 %v484, %v482
        %v533 = vpack.c.b16 %v485, %v483
        %v534 = vpack.c.b16 %v488, %v486
        %v535 = vpack.c.b16 %v489, %v487
        %v536 = vpack.c.b16 %v492, %v490
        %v537 = vpack.c.b16 %v493, %v491
        %v538 = vpack.c.b16 %v496, %v494
        %v539 = vpack.c.b16 %v497, %v495
        %v540 = vpack.c.b16 %v500, %v498
        %v541 = vpack.c.b16 %v501, %v499
        %v542 = vpack.c.b16 %v504, %v502
        %v543 = vpack.c.b16 %v505, %v503
        %v544 = vpack.c.b16 %v508, %v506
        %v545 = vpack.c.b16 %v509, %v507
        %v546 = vpack.c.b16 %v512, %v510
        %v547 = vpack.c.b16 %v513, %v511
        %v548 = vpack.c.b16 %v516, %v514
        %v549 = vpack.c.b16 %v517, %v515
        %582 = vmatprep.subr.bf16.mxu0 %v533
        %583 = vmatpush1.bf16.msra.mxu0 %v532
        %584 = vmatprep.subr.bf16.mxu0 %v531
        %585 = vmatpush1.bf16.msra.mxu0 %v530
        %586 = vmatprep.subr.bf16.mxu0 %v529
        %587 = vmatpush1.bf16.msra.mxu0 %v528
        %588 = vmatprep.subr.bf16.mxu0 %v527
        %589 = vmatpush1.bf16.msra.mxu0 %v526
        %590 = vmatprep.subr.bf16.mxu0 %v525
        %591 = vmatpush1.bf16.msra.mxu0 %v524
        %592 = vmatprep.subr.bf16.mxu0 %v523
        %593 = vmatpush1.bf16.msra.mxu0 %v522
        %594 = vmatprep.subr.bf16.mxu0 %v521
        %595 = vmatpush1.bf16.msra.mxu0 %v520
        %596 = vmatprep.subr.bf16.mxu0 %v519
        %597 = vmatpush1.bf16.msra.mxu0 %v518
        %598 = vmatprep.subr.bf16.mxu0 %v549
        %599 = vmatpush2.bf16.msra.mxu0 %v548
        %600 = vmatprep.subr.bf16.mxu0 %v547
        %601 = vmatpush2.bf16.msra.mxu0 %v546
        %602 = vmatprep.subr.bf16.mxu0 %v545
        %603 = vmatpush2.bf16.msra.mxu0 %v544
        %604 = vmatprep.subr.bf16.mxu0 %v543
        %605 = vmatpush2.bf16.msra.mxu0 %v542
        %606 = vmatprep.subr.bf16.mxu0 %v541
        %607 = vmatpush2.bf16.msra.mxu0 %v540
        %608 = vmatprep.subr.bf16.mxu0 %v539
        %609 = vmatpush2.bf16.msra.mxu0 %v538
        %610 = vmatprep.subr.bf16.mxu0 %v537
        %611 = vmatpush2.bf16.msra.mxu0 %v536
        %612 = vmatprep.subr.bf16.mxu0 %v535
        %613 = vmatpush2.bf16.msra.mxu0 %v534
        %614 = vmatprep.mubr.bf16.mxu0 %v377
        %615 = vmatmul.mubr.bf16.gmra.mxu0 %v376
        %v616 = vpop.f32.mrf.mxu0
        %v617 = vadd.f32 %v415, %v616
        %v618 = vpop.f32.mrf.mxu0
        %v619 = vadd.f32 %v419, %v618
        %v620 = vpop.f32.mrf.mxu0
        %v621 = vadd.f32 %v415, %v620
        %v622 = vpop.f32.mrf.mxu0
        %v623 = vadd.f32 %v419, %v622
        %624 = vdwg.mxu0
        %v625 = vmax.f32 %v617, 0.0
        %v626 = vmax.f32 %v619, 0.0
        %v627 = vmax.f32 %v621, 0.0
        %v628 = vmax.f32 %v623, 0.0
        %v629 = vpack.c.bf16 %v627, %v625
        %v630 = vpack.c.bf16 %v628, %v626
        %v631 = vld [vmem:[%s5] sm:$0xf]
        %v632 = vld [vmem:[%s5 + $0x4] sm:$0xf]
        %v633 = vld [vmem:[%s5 + $0x8] sm:$0xf]
        %v634 = vld [vmem:[%s5 + $0xc] sm:$0xf]
        %v635 = vld [vmem:[%s5 + $0x10] sm:$0xf]
        %v636 = vld [vmem:[%s5 + $0x14] sm:$0xf]
        %v637 = vld [vmem:[%s5 + $0x18] sm:$0xf]
        %v638 = vld [vmem:[%s5 + $0x1c] sm:$0xf]
        %v639 = vld [vmem:[%s5 + $0x20] sm:$0xf]
        %v640 = vld [vmem:[%s5 + $0x24] sm:$0xf]
        %v641 = vld [vmem:[%s5 + $0x28] sm:$0xf]
        %v642 = vld [vmem:[%s5 + $0x2c] sm:$0xf]
        %v643 = vld [vmem:[%s5 + $0x30] sm:$0xf]
        %v644 = vld [vmem:[%s5 + $0x34] sm:$0xf]
        %v645 = vld [vmem:[%s5 + $0x38] sm:$0xf]
        %v646 = vld [vmem:[%s5 + $0x3c] sm:$0xf]
        %v647 = vld [vmem:[%s5 + $0x40] sm:$0xf]
        %v648 = vld [vmem:[%s5 + $0x44] sm:$0xf]
        %v649 = vld [vmem:[%s5 + $0x48] sm:$0xf]
        %v650 = vld [vmem:[%s5 + $0x4c] sm:$0xf]
        %v651 = vld [vmem:[%s5 + $0x50] sm:$0xf]
        %v652 = vld [vmem:[%s5 + $0x54] sm:$0xf]
        %v653 = vld [vmem:[%s5 + $0x58] sm:$0xf]
        %v654 = vld [vmem:[%s5 + $0x5c] sm:$0xf]
        %v655 = vld [vmem:[%s5 + $0x60] sm:$0xf]
        %v656 = vld [vmem:[%s5 + $0x64] sm:$0xf]
        %v657 = vld [vmem:[%s5 + $0x68] sm:$0xf]
        %v658 = vld [vmem:[%s5 + $0x6c] sm:$0xf]
        %v659 = vld [vmem:[%s5 + $0x70] sm:$0xf]
        %v660 = vld [vmem:[%s5 + $0x74] sm:$0xf]
        %v661 = vld [vmem:[%s5 + $0x78] sm:$0xf]
        %v662 = vld [vmem:[%s5 + $0x7c] sm:$0xf]
        %v663 = vld [vmem:[%s6] sm:$0x1]
        %v665 = vlaneseq
        %v666 = vshrl.u32 %v665, 7
        %v667 = vsub.s32 0, %v666
        %v668 = vrot.slane %v663, %v667
        %v702 = vunpack.c.l.b16 %v631
        %v703 = vunpack.c.l.b16 %v632
        %v704 = vunpack.c.l.b16 %v633
        %v705 = vunpack.c.l.b16 %v634
        %v706 = vunpack.c.l.b16 %v635
        %v707 = vunpack.c.l.b16 %v636
        %v708 = vunpack.c.l.b16 %v637
        %v709 = vunpack.c.l.b16 %v638
        %v710 = vunpack.c.l.b16 %v639
        %v711 = vunpack.c.l.b16 %v640
        %v712 = vunpack.c.l.b16 %v641
        %v713 = vunpack.c.l.b16 %v642
        %v714 = vunpack.c.l.b16 %v643
        %v715 = vunpack.c.l.b16 %v644
        %v716 = vunpack.c.l.b16 %v645
        %v717 = vunpack.c.l.b16 %v646
        %v718 = vunpack.c.l.b16 %v647
        %v719 = vunpack.c.l.b16 %v648
        %v720 = vunpack.c.l.b16 %v649
        %v721 = vunpack.c.l.b16 %v650
        %v722 = vunpack.c.l.b16 %v651
        %v723 = vunpack.c.l.b16 %v652
        %v724 = vunpack.c.l.b16 %v653
        %v725 = vunpack.c.l.b16 %v654
        %v726 = vunpack.c.l.b16 %v655
        %v727 = vunpack.c.l.b16 %v656
        %v728 = vunpack.c.l.b16 %v657
        %v729 = vunpack.c.l.b16 %v658
        %v730 = vunpack.c.l.b16 %v659
        %v731 = vunpack.c.l.b16 %v660
        %v732 = vunpack.c.l.b16 %v661
        %v733 = vunpack.c.l.b16 %v662
        %v734 = vpack.c.b16 %v703, %v702
        %v735 = vpack.c.b16 %v705, %v704
        %v736 = vpack.c.b16 %v707, %v706
        %v737 = vpack.c.b16 %v709, %v708
        %v738 = vpack.c.b16 %v711, %v710
        %v739 = vpack.c.b16 %v713, %v712
        %v740 = vpack.c.b16 %v715, %v714
        %v741 = vpack.c.b16 %v717, %v716
        %v742 = vpack.c.b16 %v719, %v718
        %v743 = vpack.c.b16 %v721, %v720
        %v744 = vpack.c.b16 %v723, %v722
        %v745 = vpack.c.b16 %v725, %v724
        %v746 = vpack.c.b16 %v727, %v726
        %v747 = vpack.c.b16 %v729, %v728
        %v748 = vpack.c.b16 %v731, %v730
        %v749 = vpack.c.b16 %v733, %v732
        %766 = vmatprep.subr.bf16.mxu0 0
        %767 = vmatpush1.bf16.msra.mxu0 %v741
        %768 = vmatprep.subr.bf16.mxu0 0
        %769 = vmatpush1.bf16.msra.mxu0 %v740
        %770 = vmatprep.subr.bf16.mxu0 0
        %771 = vmatpush1.bf16.msra.mxu0 %v739
        %772 = vmatprep.subr.bf16.mxu0 0
        %773 = vmatpush1.bf16.msra.mxu0 %v738
        %774 = vmatprep.subr.bf16.mxu0 0
        %775 = vmatpush1.bf16.msra.mxu0 %v737
        %776 = vmatprep.subr.bf16.mxu0 0
        %777 = vmatpush1.bf16.msra.mxu0 %v736
        %778 = vmatprep.subr.bf16.mxu0 0
        %779 = vmatpush1.bf16.msra.mxu0 %v735
        %780 = vmatprep.subr.bf16.mxu0 0
        %781 = vmatpush1.bf16.msra.mxu0 %v734
        %782 = vmatprep.subr.bf16.mxu0 0
        %783 = vmatpush2.bf16.msra.mxu0 %v749
        %784 = vmatprep.subr.bf16.mxu0 0
        %785 = vmatpush2.bf16.msra.mxu0 %v748
        %786 = vmatprep.subr.bf16.mxu0 0
        %787 = vmatpush2.bf16.msra.mxu0 %v747
        %788 = vmatprep.subr.bf16.mxu0 0
        %789 = vmatpush2.bf16.msra.mxu0 %v746
        %790 = vmatprep.subr.bf16.mxu0 0
        %791 = vmatpush2.bf16.msra.mxu0 %v745
        %792 = vmatprep.subr.bf16.mxu0 0
        %793 = vmatpush2.bf16.msra.mxu0 %v744
        %794 = vmatprep.subr.bf16.mxu0 0
        %795 = vmatpush2.bf16.msra.mxu0 %v743
        %796 = vmatprep.subr.bf16.mxu0 0
        %797 = vmatpush2.bf16.msra.mxu0 %v742
        %798 = vmatprep.mubr.bf16.mxu0 %v630
        %799 = vmatmul.mubr.bf16.gmra.mxu0 %v629
        %v800 = vpop.f32.mrf.mxu0
        %v801 = vadd.f32 %v668, %v800
        %v802 = vpop.f32.mrf.mxu0
        %v803 = vpop.f32.mrf.mxu0
        %v804 = vadd.f32 %v668, %v803
        %v805 = vpop.f32.mrf.mxu0
        %806 = vdwg.mxu0
        %vm807 = vcmask 31744
        %808 = vst.msk [vmem:[%s295] sm:$0xff] %vm807, %v801
        %809 = vst.msk [vmem:[%s295 + $0x8] sm:$0xff] %vm807, %v804
        %s810 = smul.u32 2, %s19
        %p811 = scmp.lt.s32.totalorder %s810, 3
        %s812 = scalar_select %p811, %s810, 3
        %s813 = smul.addr %s812, 8
        %s814 = scalar_lea.vmem %s7, %s813
        // Predicated region
        $region53: #{ddqn_mlp_pallas.1} parent=47 // pred_check
          %p815 = pneg %p189
        $region54: #{ddqn_mlp_pallas.1} parent=47 // pred_check_branch
          %817 = sbr.rel (%p815) target = $region56
        $region55: #{ddqn_mlp_pallas.1} parent=47 // pred_region
          %s818 = smul.u32 2, %s19
        $region56: #{ddqn_mlp_pallas.1} parent=47 // pred_fallthru
          _
      $region48: #{ddqn_mlp_pallas.1} parent=5 // pred_fallthru
        _
      %p819 = scmp.le.s32.totalorder 2, %s14
      // Predicated region
      $region57: #{ddqn_mlp_pallas.1} parent=5 // pred_check
        %p820 = pneg %p819
      $region58: #{ddqn_mlp_pallas.1} parent=5 // pred_check_branch
        %822 = sbr.rel (%p820) target = $region60
      $region59: #{ddqn_mlp_pallas.1} parent=5 // pred_region
        %s823 = ssub.s32 %s14, 2
        // Predicated region
        $region61: #{ddqn_mlp_pallas.1} parent=59 // pred_check
          %p824 = pneg %p195
        $region62: #{ddqn_mlp_pallas.1} parent=59 // pred_check_branch
          %826 = sbr.rel (%p824) target = $region64
        $region63: #{ddqn_mlp_pallas.1} parent=59 // pred_region
          %s827 = smul.u32 2, %s20
          %p828 = scmp.lt.s32.totalorder %s827, 3
          %s829 = scalar_select %p828, %s827, 3
          %s830 = smul.addr %s829, 8
          %s831 = scalar_lea.vmem %s7, %s830
        $region64: #{ddqn_mlp_pallas.1} parent=59 // pred_fallthru
          _
      $region60: #{ddqn_mlp_pallas.1} parent=5 // pred_fallthru
        _
    $region6: #{ddqn_mlp_pallas.1} parent=1 // loop_footer
      %s18 = sadd.s32 1, %s14
    $region7: #{ddqn_mlp_pallas.1} parent=1 // loop_footer_branch
      %13 = sbr.rel target = $region3
    $region8: #{ddqn_mlp_pallas.1} parent=1 // loop_exit
      _
    %832 = vsyncpa [#allocation3], 1
    %s833 = scalar_lea.sflag [#allocation3], 1
    %834 = vsyncpa %s833, 1

</llo_original>
